<compile_context>
chip_gen: v5e
topology: v5e:2x2
jax: 0.10.0
libtpu: 0.0.40
codegen_flags: <defaults>
</compile_context>

<pallas_src>
import jax
import jax.numpy as jnp
import numpy as np
from jax.experimental import pallas as pl
from jax.experimental.pallas import tpu as pltpu

EPS = 1e-5
HIGHEST = jax.lax.Precision.HIGHEST


# --------------------------------- Pallas kernel ---------------------------------
def affine_kernel(uvs_ref, res_ref, wt_ref, bt_ref, out_ref):
    """Pointwise affine stage in a lane-dense layout (channels on sublanes, pixels on lanes).

    uvs_ref : (3, TN)            u = am0+am1, v = am2+am3, s = xy0+xy1 (per pixel)
    res_ref : (C, TN)            residual (= input x)
    wt_ref  : (out_planes, 2)    W_total^T  (folded conv1..conv4 + BN chain)
    bt_ref  : (out_planes, 1)    b_total
    out_ref : (out_planes, TN)
    """
    u = uvs_ref[0:1, :]                  # (1, TN)
    v = uvs_ref[1:2, :]
    s = uvs_ref[2:3, :]

    # einsum('nab,ncd->nad') with am=(N,2,2), xy=(N,2,1) reduces elementwise to:
    #   feat0 = (am0+am1)*(xy0+xy1),  feat1 = (am2+am3)*(xy0+xy1)
    feat0 = u * s                        # (1, TN)
    feat1 = v * s                        # (1, TN)

    # Folded 1x1-conv + BN chain: K=2 contraction as two broadcast FMAs on the VPU.
    w0 = wt_ref[:, 0:1]                  # (out_planes, 1)
    w1 = wt_ref[:, 1:2]                  # (out_planes, 1)
    out = w0 * feat0 + w1 * feat1 + bt_ref[...] + res_ref[...]   # (out_planes, TN)
    out_ref[...] = out.astype(out_ref.dtype)


# ----------------------------------- wrapper -----------------------------------
def affine_transform_pallas(x_nchw, params, tile_n=1024):
    b, c, h, w = x_nchw.shape
    N = b * h * w

    # ---- fold the 1x1-conv + BatchNorm (eval-mode) chain into one affine map ----
    def stage(wk, bk, bnk):
        gamma, beta, mean, var = params[bnk]
        s = gamma / jnp.sqrt(var + EPS)
        return params[wk] * s[None, :], (params[bk] - mean) * s + beta

    A1, c1 = stage("w1", "b1", "bn1")
    A2, c2 = stage("w2", "b2", "bn2")
    A3, c3 = stage("w3", "b3", "bn3")
    A4, c4 = stage("w4", "b4", "bn4")

    def hdot(a, bb):
        return jnp.dot(a, bb, precision=HIGHEST)

    W_total = hdot(hdot(hdot(A1, A2), A3), A4)                      # (2, out_planes)
    b_total = hdot(hdot(hdot(c1, A2) + c2, A3) + c3, A4) + c4       # (out_planes,)
    out_planes = W_total.shape[1]
    assert out_planes == c, "residual add requires out_planes == in_planes"

    # ---- fold the two 3x3 convs into ONE 3-output-channel conv (u, v, s) ----
    wam, wxy = params["wam"], params["wxy"]                         # HWIO layout
    w_red = jnp.stack([wam[..., 0] + wam[..., 1],
                       wam[..., 2] + wam[..., 3],
                       wxy[..., 0] + wxy[..., 1]], axis=-1)         # (3, 3, c, 3)
    b_red = jnp.stack([params["bam"][0] + params["bam"][1],
                       params["bam"][2] + params["bam"][3],
                       params["bxy"][0] + params["bxy"][1]])        # (3,)

    # im2col-free: one tiny 3-channel conv instead of a 9x patch blow-up in HBM
    # (review item 8, option b). Everything downstream runs in the Pallas kernel.
    uvs = jax.lax.conv_general_dilated(
        x_nchw, jnp.transpose(w_red, (3, 2, 0, 1)), (1, 1), "SAME",
        dimension_numbers=("NCHW", "OIHW", "NCHW"),
        precision=HIGHEST) + b_red[None, :, None, None]             # (b, 3, h, w)

    # ---- transposed channel-major layout: channels on sublanes, pixels on lanes ----
    uvs_t = jnp.transpose(uvs, (1, 0, 2, 3)).reshape(3, N)          # (3, N)
    res_t = jnp.transpose(x_nchw, (1, 0, 2, 3)).reshape(c, N)       # (c, N)

    # ---- tile sizing: multiple of 256, pad N, keep >=2 grid steps when possible ----
    unit = 256
    tile_n = int(min(tile_n, max(unit, unit * ((N // 2) // unit))))
    n_pad = tile_n * pl.cdiv(N, tile_n)
    if n_pad != N:
        uvs_t = jnp.pad(uvs_t, ((0, 0), (0, n_pad - N)))
        res_t = jnp.pad(res_t, ((0, 0), (0, n_pad - N)))
    grid = (n_pad // tile_n,)

    out_t = pl.pallas_call(
        affine_kernel,
        out_shape=jax.ShapeDtypeStruct((out_planes, n_pad), x_nchw.dtype),
        grid_spec=pltpu.PrefetchScalarGridSpec(
            num_scalar_prefetch=0,
            grid=grid,
            in_specs=[
                pl.BlockSpec((3, tile_n), lambda i: (0, i)),
                pl.BlockSpec((c, tile_n), lambda i: (0, i)),
                pl.BlockSpec((out_planes, 2), lambda i: (0, 0)),
                pl.BlockSpec((out_planes, 1), lambda i: (0, 0)),
            ],
            out_specs=pl.BlockSpec((out_planes, tile_n), lambda i: (0, i)),
        ),
        compiler_params=pltpu.CompilerParams(dimension_semantics=("parallel",)),
    )(uvs_t, res_t, jnp.transpose(W_total), b_total[:, None])

    out_t = out_t[:, :N]
    return jnp.transpose(out_t.reshape(out_planes, b, h, w), (1, 0, 2, 3))


# ----------------------------- reference (plain JAX) -----------------------------
def reference(x, params):
    b, c, h, w = x.shape

    def conv3x3(xx, wk, bk):
        w_oihw = jnp.transpose(params[wk], (3, 2, 0, 1))
        y = jax.lax.conv_general_dilated(
            xx, w_oihw, (1, 1), "SAME",
            dimension_numbers=("NCHW", "OIHW", "NCHW"), precision=HIGHEST)
        return y + params[bk][None, :, None, None]

    am = conv3x3(x, "wam", "bam")
    xy = conv3x3(x, "wxy", "bxy")
    am3 = jnp.transpose(am, (0, 2, 3, 1)).reshape(b * h * w, 2, 2)
    xy3 = jnp.transpose(xy, (0, 2, 3, 1)).reshape(b * h * w, 2)[..., None]
    aff = jnp.einsum("nab,ncd->nad", am3, xy3, precision=HIGHEST)
    aff = jnp.transpose(aff[..., 0].reshape(b, h, w, 2), (0, 3, 1, 2))

    def conv1x1_bn(xx, wk, bk, bnk):
        y = jnp.einsum("nchw,co->nohw", xx, params[wk], precision=HIGHEST)
        y = y + params[bk][None, :, None, None]
        gamma, beta, mean, var = params[bnk]
        return ((y - mean[None, :, None, None])
                / jnp.sqrt(var[None, :, None, None] + EPS)
                * gamma[None, :, None, None] + beta[None, :, None, None])

    f = conv1x1_bn(aff, "w1", "b1", "bn1")
    f = conv1x1_bn(f, "w2", "b2", "bn2")
    f = conv1x1_bn(f, "w3", "b3", "bn3")
    f = conv1x1_bn(f, "w4", "b4", "bn4")
    return f + x


def init_params(key, in_planes, out_planes):
    ks = jax.random.split(key, 32)
    ki = iter(range(32))

    def nrm(shape, scale=0.1):
        return scale * jax.random.normal(ks[next(ki)], shape, jnp.float32)

    params = {
        "wam": nrm((3, 3, in_planes, 4)), "bam": nrm((4,)),
        "wxy": nrm((3, 3, in_planes, 2)), "bxy": nrm((2,)),
    }
    for cin, cout, tag in [(2, 64, "1"), (64, 128, "2"), (128, 512, "3"), (512, out_planes, "4")]:
        params["w" + tag] = nrm((cin, cout))
        params["b" + tag] = nrm((cout,))
        gamma = 1.0 + 0.1 * jax.random.normal(ks[next(ki)], (cout,), jnp.float32)
        beta = nrm((cout,))
        mean = nrm((cout,))
        var = 0.5 + jnp.abs(jax.random.normal(ks[next(ki)], (cout,), jnp.float32))
        params["bn" + tag] = (gamma, beta, mean, var)
    return params


if __name__ == "__main__":
    key = jax.random.PRNGKey(0)
    k_x, k_p = jax.random.split(key)

    in_planes = out_planes = 4          # residual add requires out_planes == in_planes
    b, h, w = 2, 16, 16
    x = jax.random.normal(k_x, (b, in_planes, h, w), jnp.float32)   # NCHW, like PyTorch
    params = init_params(k_p, in_planes, out_planes)

    out = jax.block_until_ready(affine_transform_pallas(x, params))
    ref = jax.block_until_ready(reference(x, params))
    np.testing.assert_allclose(np.asarray(out), np.asarray(ref), rtol=2e-3, atol=2e-3)

    print("KERNEL_OK")
</pallas_src>

<mosaic_0001>
module attributes {stable_mosaic.version = 11 : i64} {
  func.func @affine_kernel(%arg0: i32, %arg1: memref<3x256xf32, #tpu.memory_space<vmem>>, %arg2: memref<4x256xf32, #tpu.memory_space<vmem>>, %arg3: memref<4x2xf32, #tpu.memory_space<vmem>>, %arg4: memref<4x1xf32, #tpu.memory_space<vmem>>, %arg5: memref<4x256xf32, #tpu.memory_space<vmem>>) attributes {dimension_semantics = [#tpu.dimension_semantics<parallel>], iteration_bounds = array<i64: 2>, scalar_prefetch = 0 : i64, scratch_operands = 0 : i64, tpu.core_type = #tpu.core_type<tc>, window_params = [{transform_indices = @transform_0, window_bounds = array<i64: 3, 256>}, {transform_indices = @transform_1, window_bounds = array<i64: 4, 256>}, {pipeline_mode = #tpu.pipeline_mode<synchronous>, transform_indices = @transform_2, window_bounds = array<i64: 4, 2>}, {pipeline_mode = #tpu.pipeline_mode<synchronous>, transform_indices = @transform_3, window_bounds = array<i64: 4, 1>}, {transform_indices = @transform_4, window_bounds = array<i64: 4, 256>}]} {
    %c0 = arith.constant 0 : index
    %c0_0 = arith.constant 0 : index
    %0 = vector.load %arg1[%c0, %c0_0] : memref<3x256xf32, #tpu.memory_space<vmem>>, vector<1x256xf32>
    %c1 = arith.constant 1 : index
    %c0_1 = arith.constant 0 : index
    %1 = vector.load %arg1[%c1, %c0_1] : memref<3x256xf32, #tpu.memory_space<vmem>>, vector<1x256xf32>
    %c2 = arith.constant 2 : index
    %c0_2 = arith.constant 0 : index
    %2 = vector.load %arg1[%c2, %c0_2] : memref<3x256xf32, #tpu.memory_space<vmem>>, vector<1x256xf32>
    %3 = arith.mulf %0, %2 : vector<1x256xf32>
    %4 = arith.mulf %1, %2 : vector<1x256xf32>
    %c0_3 = arith.constant 0 : index
    %c0_4 = arith.constant 0 : index
    %5 = vector.load %arg3[%c0_3, %c0_4] : memref<4x2xf32, #tpu.memory_space<vmem>>, vector<4x1xf32>
    %c0_5 = arith.constant 0 : index
    %c1_6 = arith.constant 1 : index
    %6 = vector.load %arg3[%c0_5, %c1_6] : memref<4x2xf32, #tpu.memory_space<vmem>>, vector<4x1xf32>
    %7 = vector.broadcast %5 : vector<4x1xf32> to vector<4x256xf32>
    %8 = vector.broadcast %3 : vector<1x256xf32> to vector<4x256xf32>
    %9 = arith.mulf %7, %8 : vector<4x256xf32>
    %10 = vector.broadcast %6 : vector<4x1xf32> to vector<4x256xf32>
    %11 = vector.broadcast %4 : vector<1x256xf32> to vector<4x256xf32>
    %12 = arith.mulf %10, %11 : vector<4x256xf32>
    %13 = arith.addf %9, %12 : vector<4x256xf32>
    %c0_7 = arith.constant 0 : index
    %c0_8 = arith.constant 0 : index
    %14 = vector.load %arg4[%c0_7, %c0_8] : memref<4x1xf32, #tpu.memory_space<vmem>>, vector<4x1xf32>
    %15 = vector.broadcast %14 : vector<4x1xf32> to vector<4x256xf32>
    %16 = arith.addf %13, %15 : vector<4x256xf32>
    %c0_9 = arith.constant 0 : index
    %c0_10 = arith.constant 0 : index
    %17 = vector.load %arg2[%c0_9, %c0_10] : memref<4x256xf32, #tpu.memory_space<vmem>>, vector<4x256xf32>
    %18 = arith.addf %16, %17 : vector<4x256xf32>
    %c0_11 = arith.constant 0 : index
    %c0_12 = arith.constant 0 : index
    %19 = vector.load %arg5[%c0_11, %c0_12] : memref<4x256xf32, #tpu.memory_space<vmem>>, vector<4x256xf32>
    tpu.vector_store %arg5[%c0_11, %c0_12], %18 {strides = array<i32>} : memref<4x256xf32, #tpu.memory_space<vmem>>, vector<4x256xf32>,
    return
  }
  func.func @transform_0(%arg0: i32) -> (i32, i32) {
    %c0_i32 = arith.constant 0 : i32
    %c0_i32_0 = arith.constant 0 : i32
    return %c0_i32, %arg0 : i32, i32
  }
  func.func @transform_1(%arg0: i32) -> (i32, i32) {
    %c0_i32 = arith.constant 0 : i32
    %c0_i32_0 = arith.constant 0 : i32
    return %c0_i32, %arg0 : i32, i32
  }
  func.func @transform_2(%arg0: i32) -> (i32, i32) {
    %c0_i32 = arith.constant 0 : i32
    %c0_i32_0 = arith.constant 0 : i32
    %c0_i32_1 = arith.constant 0 : i32
    return %c0_i32, %c0_i32_0 : i32, i32
  }
  func.func @transform_3(%arg0: i32) -> (i32, i32) {
    %c0_i32 = arith.constant 0 : i32
    %c0_i32_0 = arith.constant 0 : i32
    %c0_i32_1 = arith.constant 0 : i32
    return %c0_i32, %c0_i32_0 : i32, i32
  }
  func.func @transform_4(%arg0: i32) -> (i32, i32) {
    %c0_i32 = arith.constant 0 : i32
    %c0_i32_0 = arith.constant 0 : i32
    return %c0_i32, %arg0 : i32, i32
  }
}

</mosaic_0001>

<llo_original>
// kernel: tpu_custom_call.1
$region0: #{tpu_custom_call.1}
  #allocation0 [shape = 'u32[]', space=smem, size = 0x4, offset = 0x4, fixed_abs, tag = 'smem constant byte address 0x4 - core index']
  #allocation1 [shape = 'u32[72,128]{1,0:T(1,128)}', space=vmem, size = 0x9000, scoped, tag = 'internal scratch']
  %s0 = inlined_call_operand.hbm [shape: f32[3,512], index: 0, kind: input, shape index: {}]
  %s1 = inlined_call_operand.hbm [shape: f32[4,512], index: 1, kind: input, shape index: {}]
  %s2 = inlined_call_operand.vmem [shape: f32[4,2], index: 2, kind: input, shape index: {}]
  %s3 = inlined_call_operand.vmem [shape: f32[4,1], index: 3, kind: input, shape index: {}]
  %s4 = inlined_call_operand.hbm [shape: f32[4,512], index: 4, kind: output, shape index: {}]
  %s5 = sld [smem:[#allocation0]]
  $region57: #{tpu_custom_call.1} parent=0
    _
  %s7 = ssub.s32 1, %s5
  %s8 = scalar_select 0, %s7, %s5
  $region1: #{tpu_custom_call.1} parent=0
    #allocation2 [shape = 'u8[8192]{0}', space=vmem, size = 0x2000, scoped, tag = 'input window, operand 0']
    #allocation3 [shape = 's32[2]{0}', space=sflag, size = 0x8, scoped, tag = 'scoped memory for tpu_custom_call.1']
    #allocation4 [shape = 's32[2]{0}', space=sflag, size = 0x8, scoped, tag = 'scoped memory for tpu_custom_call.1']
    #allocation5 [shape = 'u8[8192]{0}', space=vmem, size = 0x2000, scoped, tag = 'input window, operand 1']
    #allocation6 [shape = 's32[2]{0}', space=sflag, size = 0x8, scoped, tag = 'scoped memory for tpu_custom_call.1']
    #allocation7 [shape = 'u8[8192]{0}', space=vmem, size = 0x2000, scoped, tag = 'output window, operand 0']
    %9 = vsyncpa [#allocation3], 0
    %s10 = scalar_lea.sflag [#allocation3], 1
    %11 = vsyncpa %s10, 0
    %12 = vsyncpa [#allocation6], 0
    %s13 = scalar_lea.sflag [#allocation6], 1
    %14 = vsyncpa %s13, 0
    %15 = vsyncpa [#allocation4], 0
    %s16 = scalar_lea.sflag [#allocation4], 1
    %17 = vsyncpa %s16, 0
    loop: start=0, step=1, limit=4
    $region2: #{tpu_custom_call.1} parent=1 // loop_pre_header
      _
    $region3: #{tpu_custom_call.1} parent=1 // loop_header
      %s19 = sphi 0, %s23
      %p20 = scmp.ge.s32.totalorder %s19, 4
      %s29 = sphi 0, %s31
      %s32 = sphi 0, %s29
      %s33 = sphi 0, %s32
      %s49 = sphi 0, %s33
      %s55 = sphi 0, %s57
      %s58 = sphi 0, %s55
      %s59 = sphi 0, %s58
      %s75 = sphi 0, %s59
      %s79 = sphi 0, %s79
      %s81 = sphi 0, %s79
      %s82 = sphi 0, %s81
      %s96 = sphi 0, %s82
      %s100 = sphi 0, %s100
      %s102 = sphi 0, %s100
      %s103 = sphi 0, %s102
      %s117 = sphi 0, %s103
      %s123 = sphi 0, %s125
      %s126 = sphi 0, %s123
      %s127 = sphi 0, %s126
      %s143 = sphi 0, %s127
    $region4: #{tpu_custom_call.1} parent=1 // loop_header_branch
      %22 = sbr.rel (%p20) target = $region8
    $region5: #{tpu_custom_call.1} parent=1 // loop_body
      %s24 = ssub.s32 %s19, 1
      %s25 = ssub.s32 %s19, 2
      %s26 = sadd.s32 %s19, 1
      %s27 = ssub.s32 %s19, %s26
      %p28 = scmp.eq.s32.totalorder %s27, 0
      %s30 = sadd.s32 %s29, 1
      %s31 = scalar_select %p28, %s29, %s30
      %p34 = pneg %p28
      %p35 = scmp.eq.s32.totalorder %s19, 1
      %p36 = por %p34, %p35
      %p37 = scmp.ne.s32.totalorder %s29, %s32
      %p38 = scmp.eq.s32.totalorder %s19, 0
      %p39 = por %p37, %p38
      %p40 = scmp.ne.s32.totalorder %s29, %s32
      %p41 = scmp.eq.s32.totalorder %s24, 1
      %p42 = por %p40, %p41
      %p43 = scmp.ne.s32.totalorder %s32, %s33
      %p44 = scmp.eq.s32.totalorder %s24, 0
      %p45 = por %p43, %p44
      %p46 = scmp.ne.s32.totalorder %s32, %s33
      %p47 = scmp.eq.s32.totalorder %s25, 1
      %p48 = por %p46, %p47
      %p50 = scmp.ne.s32.totalorder %s33, %s49
      %p51 = scmp.eq.s32.totalorder %s25, 0
      %p52 = por %p50, %p51
      %s53 = ssub.s32 %s19, %s26
      %p54 = scmp.eq.s32.totalorder %s53, 0
      %s56 = sadd.s32 %s55, 1
      %s57 = scalar_select %p54, %s55, %s56
      %p60 = pneg %p54
      %p61 = scmp.eq.s32.totalorder %s19, 1
      %p62 = por %p60, %p61
      %p63 = scmp.ne.s32.totalorder %s55, %s58
      %p64 = scmp.eq.s32.totalorder %s19, 0
      %p65 = por %p63, %p64
      %p66 = scmp.ne.s32.totalorder %s55, %s58
      %p67 = scmp.eq.s32.totalorder %s24, 1
      %p68 = por %p66, %p67
      %p69 = scmp.ne.s32.totalorder %s58, %s59
      %p70 = scmp.eq.s32.totalorder %s24, 0
      %p71 = por %p69, %p70
      %p72 = scmp.ne.s32.totalorder %s58, %s59
      %p73 = scmp.eq.s32.totalorder %s25, 1
      %p74 = por %p72, %p73
      %p76 = scmp.ne.s32.totalorder %s59, %s75
      %p77 = scmp.eq.s32.totalorder %s25, 0
      %p78 = por %p76, %p77
      %s80 = sadd.s32 %s79, 1
      %p83 = scmp.eq.s32.totalorder %s19, 1
      %p84 = scmp.ne.s32.totalorder %s79, %s81
      %p85 = scmp.eq.s32.totalorder %s19, 0
      %p86 = por %p84, %p85
      %p87 = scmp.ne.s32.totalorder %s79, %s81
      %p88 = scmp.eq.s32.totalorder %s24, 1
      %p89 = por %p87, %p88
      %p90 = scmp.ne.s32.totalorder %s81, %s82
      %p91 = scmp.eq.s32.totalorder %s24, 0
      %p92 = por %p90, %p91
      %p93 = scmp.ne.s32.totalorder %s81, %s82
      %p94 = scmp.eq.s32.totalorder %s25, 1
      %p95 = por %p93, %p94
      %p97 = scmp.ne.s32.totalorder %s82, %s96
      %p98 = scmp.eq.s32.totalorder %s25, 0
      %p99 = por %p97, %p98
      %s101 = sadd.s32 %s100, 1
      %p104 = scmp.eq.s32.totalorder %s19, 1
      %p105 = scmp.ne.s32.totalorder %s100, %s102
      %p106 = scmp.eq.s32.totalorder %s19, 0
      %p107 = por %p105, %p106
      %p108 = scmp.ne.s32.totalorder %s100, %s102
      %p109 = scmp.eq.s32.totalorder %s24, 1
      %p110 = por %p108, %p109
      %p111 = scmp.ne.s32.totalorder %s102, %s103
      %p112 = scmp.eq.s32.totalorder %s24, 0
      %p113 = por %p111, %p112
      %p114 = scmp.ne.s32.totalorder %s102, %s103
      %p115 = scmp.eq.s32.totalorder %s25, 1
      %p116 = por %p114, %p115
      %p118 = scmp.ne.s32.totalorder %s103, %s117
      %p119 = scmp.eq.s32.totalorder %s25, 0
      %p120 = por %p118, %p119
      %s121 = ssub.s32 %s19, %s26
      %p122 = scmp.eq.s32.totalorder %s121, 0
      %s124 = sadd.s32 %s123, 1
      %s125 = scalar_select %p122, %s123, %s124
      %p128 = pneg %p122
      %p129 = scmp.eq.s32.totalorder %s19, 1
      %p130 = por %p128, %p129
      %p131 = scmp.ne.s32.totalorder %s123, %s126
      %p132 = scmp.eq.s32.totalorder %s19, 0
      %p133 = por %p131, %p132
      %p134 = scmp.ne.s32.totalorder %s123, %s126
      %p135 = scmp.eq.s32.totalorder %s24, 1
      %p136 = por %p134, %p135
      %p137 = scmp.ne.s32.totalorder %s126, %s127
      %p138 = scmp.eq.s32.totalorder %s24, 0
      %p139 = por %p137, %p138
      %p140 = scmp.ne.s32.totalorder %s126, %s127
      %p141 = scmp.eq.s32.totalorder %s25, 1
      %p142 = por %p140, %p141
      %p144 = scmp.ne.s32.totalorder %s127, %s143
      %p145 = scmp.eq.s32.totalorder %s25, 0
      %p146 = por %p144, %p145
      %p147 = scmp.le.s32.totalorder 1, %s19
      %p148 = scmp.lt.s32.totalorder %s19, 3
      %p149 = pnand %p147, %p148
      %p150 = pneg %p149
      // Predicated region
      $region9: #{tpu_custom_call.1} parent=5 // pred_check
        _
      $region10: #{tpu_custom_call.1} parent=5 // pred_check_branch
        %152 = sbr.rel (%p149) target = $region12
      $region11: #{tpu_custom_call.1} parent=5 // pred_region
        %s153 = ssub.s32 %s19, 1
        // Predicated region
        $region13: #{tpu_custom_call.1} parent=11 // pred_check
          %p154 = pneg %p92
        $region14: #{tpu_custom_call.1} parent=11 // pred_check_branch
          %156 = sbr.rel (%p154) target = $region16
        $region15: #{tpu_custom_call.1} parent=11 // pred_region
          _
        $region16: #{tpu_custom_call.1} parent=11 // pred_fallthru
          _
        // Predicated region
        $region17: #{tpu_custom_call.1} parent=11 // pred_check
          %p157 = pneg %p113
        $region18: #{tpu_custom_call.1} parent=11 // pred_check_branch
          %159 = sbr.rel (%p157) target = $region20
        $region19: #{tpu_custom_call.1} parent=11 // pred_region
          _
        $region20: #{tpu_custom_call.1} parent=11 // pred_fallthru
          _
      $region12: #{tpu_custom_call.1} parent=5 // pred_fallthru
        _
      %p160 = scmp.lt.s32.totalorder %s19, 2
      // Predicated region
      $region21: #{tpu_custom_call.1} parent=5 // pred_check
        %p161 = pneg %p160
      $region22: #{tpu_custom_call.1} parent=5 // pred_check_branch
        %163 = sbr.rel (%p161) target = $region24
      $region23: #{tpu_custom_call.1} parent=5 // pred_region
        // Predicated region
        $region25: #{tpu_custom_call.1} parent=23 // pred_check
          %p164 = pneg %p39
        $region26: #{tpu_custom_call.1} parent=23 // pred_check_branch
          %166 = sbr.rel (%p164) target = $region28
        $region27: #{tpu_custom_call.1} parent=23 // pred_region
          %s167 = sand.u32 %s29, 1
          %s168 = scalar_lea.sflag [#allocation3], %s167
          %s169 = sand.u32 %s29, 1
          %s170 = smul.addr %s169, 8
          %s171 = scalar_lea.vmem [#allocation2], %s170
          %s172 = smul.u32 2, %s19
          %174 = vsyncadd %s168, 0
          %s175 = smul.addr %s172, 4
          %s176 = scalar_lea.hbm %s0, %s175
          %s178 = sshll.u32 %s176, 4
          %s179 = int_to_ptr.hbm [resolvable:$true] %s178
          %s180 = sshll.u32 %s171, 4
          %s181 = int_to_ptr.vmem [resolvable:$true] %s180
          %183 = dma.hbm_to_vmem [thread:$0]  %s179, 128, %s181, %s168
        $region28: #{tpu_custom_call.1} parent=23 // pred_fallthru
          _
        // Predicated region
        $region29: #{tpu_custom_call.1} parent=23 // pred_check
          %p184 = pneg %p65
        $region30: #{tpu_custom_call.1} parent=23 // pred_check_branch
          %186 = sbr.rel (%p184) target = $region32
        $region31: #{tpu_custom_call.1} parent=23 // pred_region
          %s187 = sand.u32 %s55, 1
          %s188 = scalar_lea.sflag [#allocation6], %s187
          %s189 = sand.u32 %s55, 1
          %s190 = smul.addr %s189, 8
          %s191 = scalar_lea.vmem [#allocation5], %s190
          %s192 = smul.u32 2, %s19
          %194 = vsyncadd %s188, 0
          %s195 = smul.addr %s192, 4
          %s196 = scalar_lea.hbm %s1, %s195
          %s198 = sshll.u32 %s196, 4
          %s199 = int_to_ptr.hbm [resolvable:$true] %s198
          %s200 = sshll.u32 %s191, 4
          %s201 = int_to_ptr.vmem [resolvable:$true] %s200
          %203 = dma.hbm_to_vmem [thread:$0]  %s199, 128, %s201, %s188
        $region32: #{tpu_custom_call.1} parent=23 // pred_fallthru
          _
      $region24: #{tpu_custom_call.1} parent=5 // pred_fallthru
        _
      %p204 = scmp.le.s32.totalorder 1, %s19
      %p205 = scmp.lt.s32.totalorder %s19, 3
      %p206 = pnand %p204, %p205
      %p207 = pneg %p206
      // Predicated region
      $region33: #{tpu_custom_call.1} parent=5 // pred_check
        _
      $region34: #{tpu_custom_call.1} parent=5 // pred_check_branch
        %209 = sbr.rel (%p206) target = $region36
      $region35: #{tpu_custom_call.1} parent=5 // pred_region
        %s210 = ssub.s32 %s19, 1
        %s211 = sand.u32 %s32, 1
        %s212 = scalar_lea.sflag [#allocation3], %s211
        %s213 = sand.u32 %s32, 1
        %s214 = smul.addr %s213, 8
        %s215 = scalar_lea.vmem [#allocation2], %s214
        // Predicated region
        $region37: #{tpu_custom_call.1} parent=35 // pred_check
          %p216 = pneg %p45
        $region38: #{tpu_custom_call.1} parent=35 // pred_check_branch
          %218 = sbr.rel (%p216) target = $region40
        $region39: #{tpu_custom_call.1} parent=35 // pred_region
          %220 = dma.done %s212, 128
        $region40: #{tpu_custom_call.1} parent=35 // pred_fallthru
          _
        %s221 = sand.u32 %s58, 1
        %s222 = scalar_lea.sflag [#allocation6], %s221
        %s223 = sand.u32 %s58, 1
        %s224 = smul.addr %s223, 8
        %s225 = scalar_lea.vmem [#allocation5], %s224
        // Predicated region
        $region41: #{tpu_custom_call.1} parent=35 // pred_check
          %p226 = pneg %p71
        $region42: #{tpu_custom_call.1} parent=35 // pred_check_branch
          %228 = sbr.rel (%p226) target = $region44
        $region43: #{tpu_custom_call.1} parent=35 // pred_region
          %230 = dma.done %s222, 128
        $region44: #{tpu_custom_call.1} parent=35 // pred_fallthru
          _
        %s231 = sand.u32 %s32, 1
        %s232 = scalar_lea.sflag [#allocation3], %s231
        %s233 = sand.u32 %s32, 1
        %s234 = smul.addr %s233, 8
        %s235 = scalar_lea.vmem [#allocation2], %s234
        %p236 = pneg %p45
        %p237 = pneg %p42
        %s238 = sand.u32 %s58, 1
        %s239 = scalar_lea.sflag [#allocation6], %s238
        %s240 = sand.u32 %s58, 1
        %s241 = smul.addr %s240, 8
        %s242 = scalar_lea.vmem [#allocation5], %s241
        %p243 = pneg %p71
        %p244 = pneg %p68
        %p245 = pneg %p92
        %p246 = pneg %p89
        %p247 = pneg %p113
        %p248 = pneg %p110
        %p249 = pneg %p139
        %p250 = pneg %p136
        %s251 = sand.u32 %s126, 1
        %s252 = scalar_lea.sflag [#allocation4], %s251
        %s253 = sand.u32 %s126, 1
        %s254 = smul.addr %s253, 8
        %s255 = scalar_lea.vmem [#allocation7], %s254
        %s256 = smul.u32 2, %s24
        %s257 = smul.u32 2, %s24
        %s258 = smul.u32 2, %s24
        %v259 = vld [vmem:[%s215] ss:$4 sm:$0x3]
        %s260 = scalar_lea.vmem %s215, 1 [#allocation2]
        %v261 = vld [vmem:[%s260] ss:$4 sm:$0x3]
        %s262 = scalar_lea.vmem %s215, 2 [#allocation2]
        %v263 = vld [vmem:[%s262] ss:$4 sm:$0x3]
        %v264 = vmul.f32 %v259, %v263
        %v265 = vmul.f32 %v261, %v263
        %v266 = vld [vmem:[%s2] sm:$0xf]
        %268 = vset.pattern.permute.xlu0 0
        %269 = vperm.xlu0 %268, %v266
        %v270 = vpop.permute.xlu0 %269
        %v273 = vperm.slane %v264, 0
        %v274 = vperm.slane %v264, 1
        %v277 = vmul.f32 %v270, %v273
        %v278 = vmul.f32 %v270, %v274
        %279 = vset.pattern.permute.xlu0 1
        %280 = vperm.xlu0 %279, %v266
        %v281 = vpop.permute.xlu0 %280
        %v284 = vperm.slane %v265, 0
        %v285 = vperm.slane %v265, 1
        %v288 = vmul.f32 %v281, %v284
        %v289 = vmul.f32 %v281, %v285
        %v290 = vadd.f32 %v277, %v288
        %v291 = vadd.f32 %v278, %v289
        %v292 = vld [vmem:[%s3] sm:$0xf]
        %294 = vset.pattern.permute.xlu0 0
        %295 = vperm.xlu0 %294, %v292
        %v296 = vpop.permute.xlu0 %295
        %v298 = vadd.f32 %v290, %v296
        %v299 = vadd.f32 %v291, %v296
        %v300 = vld [vmem:[%s225] sm:$0xff]
        %302 = vst [vmem:[#allocation1] ss:$2 sm:$0xff] %v300
        %v303 = vld.sshfl [vmem:[#allocation1] sm:$0xff pattern:$0x75316420]
        %v304 = vld.sshfl [vmem:[#allocation1 + $0x8] sm:$0xff pattern:$0x75316420]
        %v307 = vadd.f32 %v298, %v303
        %v308 = vadd.f32 %v299, %v304
        %v311 = vrot.slane %v308, 4
        %vm312 = vcmask 1043456
        %v313 = vsel %vm312, %v307, %v311
        %315 = vst [vmem:[%s255] sm:$0xff] %v313
        %s316 = sand.u32 %s126, 1
        %s317 = scalar_lea.sflag [#allocation4], %s316
        %s318 = sand.u32 %s126, 1
        %s319 = smul.addr %s318, 8
        %s320 = scalar_lea.vmem [#allocation7], %s319
        // Predicated region
        $region45: #{tpu_custom_call.1} parent=35 // pred_check
          %p321 = pneg %p136
        $region46: #{tpu_custom_call.1} parent=35 // pred_check_branch
          %323 = sbr.rel (%p321) target = $region48
        $region47: #{tpu_custom_call.1} parent=35 // pred_region
          %s324 = smul.u32 2, %s24
          %326 = vsyncadd %s317, 0
          %s327 = smul.addr %s324, 4
          %s328 = scalar_lea.hbm %s4, %s327
          %s330 = sshll.u32 %s320, 4
          %s331 = int_to_ptr.vmem [resolvable:$true] %s330
          %s332 = sshll.u32 %s328, 4
          %s333 = int_to_ptr.hbm [resolvable:$true] %s332
          %335 = dma.vmem_to_hbm [thread:$0]  %s331, 128, %s333, %s317
        $region48: #{tpu_custom_call.1} parent=35 // pred_fallthru
          _
      $region36: #{tpu_custom_call.1} parent=5 // pred_fallthru
        _
      %p336 = scmp.le.s32.totalorder 2, %s19
      // Predicated region
      $region49: #{tpu_custom_call.1} parent=5 // pred_check
        %p337 = pneg %p336
      $region50: #{tpu_custom_call.1} parent=5 // pred_check_branch
        %339 = sbr.rel (%p337) target = $region52
      $region51: #{tpu_custom_call.1} parent=5 // pred_region
        %s340 = ssub.s32 %s19, 2
        // Predicated region
        $region53: #{tpu_custom_call.1} parent=51 // pred_check
          %p341 = pneg %p142
        $region54: #{tpu_custom_call.1} parent=51 // pred_check_branch
          %343 = sbr.rel (%p341) target = $region56
        $region55: #{tpu_custom_call.1} parent=51 // pred_region
          %s344 = sand.u32 %s127, 1
          %s345 = scalar_lea.sflag [#allocation4], %s344
          %s346 = sand.u32 %s127, 1
          %s347 = smul.addr %s346, 8
          %s348 = scalar_lea.vmem [#allocation7], %s347
          %350 = dma.done %s345, 128
        $region56: #{tpu_custom_call.1} parent=51 // pred_fallthru
          _
      $region52: #{tpu_custom_call.1} parent=5 // pred_fallthru
        _
    $region6: #{tpu_custom_call.1} parent=1 // loop_footer
      %s23 = sadd.s32 1, %s19
    $region7: #{tpu_custom_call.1} parent=1 // loop_footer_branch
      %18 = sbr.rel target = $region3
    $region8: #{tpu_custom_call.1} parent=1 // loop_exit
      _
    %351 = vsyncpa [#allocation3], 1
    %s352 = scalar_lea.sflag [#allocation3], 1
    %353 = vsyncpa %s352, 1
    %354 = vsyncpa [#allocation6], 1
    %s355 = scalar_lea.sflag [#allocation6], 1
    %356 = vsyncpa %s355, 1
    %357 = vsyncpa [#allocation4], 1
    %s358 = scalar_lea.sflag [#allocation4], 1
    %359 = vsyncpa %s358, 1

</llo_original>
